<compile_context>
chip_gen: v7x
topology: tpu7x:2x2x1
jax: 0.10.0
libtpu: 0.0.40
codegen_flags: <defaults>
</compile_context>

<pallas_src>
import functools

import jax
import jax.numpy as jnp
from jax.experimental import pallas as pl
from jax.experimental.pallas import tpu as pltpu


def _round_up(x, m):
    return (x + m - 1) // m * m


def vec_classifier_kernel(x_ref, w1_ref, b1_ref, w2_ref, b2_ref,
                          w3_ref, b3_ref, o_ref):
    # x_ref / w*_ref are bf16 (MXU inputs); accumulation + epilogue are f32.
    x = x_ref[...]                                                    # (TB, D_in) bf16

    # fc1: Linear(input_dim, 256) + ReLU
    h1 = jnp.dot(x, w1_ref[...], preferred_element_type=jnp.float32) + b1_ref[...]
    h1 = jnp.maximum(h1, 0.0).astype(jnp.bfloat16)

    # fc2: Linear(256, 512) + ReLU
    h2 = jnp.dot(h1, w2_ref[...], preferred_element_type=jnp.float32) + b2_ref[...]
    h2 = jnp.maximum(h2, 0.0).astype(jnp.bfloat16)

    # fc3: Linear(512, n_labels_padded).  Padded bias columns are -1e30 so they never
    # win the max and contribute exp(...) == 0 to the logsumexp.
    logits = jnp.dot(h2, w3_ref[...], preferred_element_type=jnp.float32) + b3_ref[...]

    # LogSoftmax(dim=1): numerically-stable, f32, lane-dense (TB, 128*k) store.
    m = jnp.max(logits, axis=-1, keepdims=True)
    shifted = logits - m
    lse = jnp.log(jnp.sum(jnp.exp(shifted), axis=-1, keepdims=True))
    o_ref[...] = (shifted - lse).astype(o_ref.dtype)


@functools.partial(jax.jit, static_argnames=("tile_batch",))
def vec_classifier(x, w1, b1, w2, b2, w3, b3, *, tile_batch=512):
    B, input_dim = x.shape
    n_labels = w3.shape[1]

    # --- pad labels to a lane-dense multiple of 128 --------------------------------
    n_pad = _round_up(max(n_labels, 128), 128)
    if n_pad != n_labels:
        w3p = jnp.pad(w3, ((0, 0), (0, n_pad - n_labels)))
        b3p = jnp.pad(b3, ((0, 0), (0, n_pad - n_labels)), constant_values=-1e30)
    else:
        w3p, b3p = w3, b3

    # --- pick batch tile & pad batch ------------------------------------------------
    # TB never exceeds the sublane-padded batch; batch is padded to a whole number of
    # tiles so every grid step sees a full (8,128)-aligned block.
    TB = min(tile_batch, _round_up(B, 8))
    B_pad = _round_up(B, TB)
    if B_pad != B:
        x = jnp.pad(x, ((0, B_pad - B), (0, 0)))

    # --- bf16 MXU inputs, f32 accumulation/biases -----------------------------------
    xb = x.astype(jnp.bfloat16)
    w1b = w1.astype(jnp.bfloat16)
    w2b = w2.astype(jnp.bfloat16)
    w3b = w3p.astype(jnp.bfloat16)

    grid = (B_pad // TB,)
    resident = lambda a: pl.BlockSpec(a.shape, lambda i: (0,) * a.ndim)

    out = pl.pallas_call(
        vec_classifier_kernel,
        out_shape=jax.ShapeDtypeStruct((B_pad, n_pad), jnp.float32),
        grid=grid,
        in_specs=[
            pl.BlockSpec((TB, input_dim), lambda i: (i, 0)),    # streamed x tile
            resident(w1b), resident(b1),                        # VMEM-resident params
            resident(w2b), resident(b2),
            resident(w3b), resident(b3p),
        ],
        out_specs=pl.BlockSpec((TB, n_pad), lambda i: (i, 0)),  # lane-dense output
        compiler_params=pltpu.CompilerParams(
            dimension_semantics=("parallel",)),                 # megacore on v7x
    )(xb, w1b, b1, w2b, b2, w3b, b3p)

    return out[:B, :n_labels]


def init_params(key, input_dim, n_labels):
    """Deterministic init mimicking torch.nn.Linear (U[-1/sqrt(fan_in), +])."""
    dims = [(input_dim, 256), (256, 512), (512, n_labels)]
    params = []
    for fan_in, fan_out in dims:
        key, kw, kb = jax.random.split(key, 3)
        bound = 1.0 / jnp.sqrt(float(fan_in))
        w = jax.random.uniform(kw, (fan_in, fan_out), jnp.float32, -bound, bound)
        b = jax.random.uniform(kb, (1, fan_out), jnp.float32, -bound, bound)
        params += [w, b]
    return params


def ref_forward(x, w1, b1, w2, b2, w3, b3):
    """Pure-JAX reference following the same bf16-in / f32-acc dtype path."""
    h1 = jnp.maximum(
        jnp.dot(x.astype(jnp.bfloat16), w1.astype(jnp.bfloat16),
                preferred_element_type=jnp.float32) + b1, 0.0)
    h2 = jnp.maximum(
        jnp.dot(h1.astype(jnp.bfloat16), w2.astype(jnp.bfloat16),
                preferred_element_type=jnp.float32) + b2, 0.0)
    logits = jnp.dot(h2.astype(jnp.bfloat16), w3.astype(jnp.bfloat16),
                     preferred_element_type=jnp.float32) + b3
    return jax.nn.log_softmax(logits, axis=1)


if __name__ == "__main__":
    key = jax.random.PRNGKey(0)
    batch, input_dim, n_labels = 64, 32, 10

    key, kx = jax.random.split(key)
    x = jax.random.normal(kx, (batch, input_dim), jnp.float32)

    w1, b1, w2, b2, w3, b3 = init_params(key, input_dim, n_labels)

    # tile_batch=32 so the small demo still exercises a multi-step batch grid.
    out = vec_classifier(x, w1, b1, w2, b2, w3, b3, tile_batch=32)
    jax.block_until_ready(out)

    ref = ref_forward(x, w1, b1, w2, b2, w3, b3)

    assert out.shape == (batch, n_labels)
    assert jnp.allclose(out, ref, atol=2e-2, rtol=2e-2)
    assert jnp.allclose(jnp.sum(jnp.exp(out), axis=1), 1.0, atol=1e-3)

    print("KERNEL_OK")
</pallas_src>

<mosaic_0001>
module attributes {stable_mosaic.version = 11 : i64} {
  func.func @vec_classifier_kernel(%arg0: i32, %arg1: memref<32x32xbf16, #tpu.memory_space<vmem>>, %arg2: memref<32x256xbf16, #tpu.memory_space<vmem>>, %arg3: memref<1x256xf32, #tpu.memory_space<vmem>>, %arg4: memref<256x512xbf16, #tpu.memory_space<vmem>>, %arg5: memref<1x512xf32, #tpu.memory_space<vmem>>, %arg6: memref<512x128xbf16, #tpu.memory_space<vmem>>, %arg7: memref<1x128xf32, #tpu.memory_space<vmem>>, %arg8: memref<32x128xf32, #tpu.memory_space<vmem>>) attributes {dimension_semantics = [#tpu.dimension_semantics<parallel>], iteration_bounds = array<i64: 2>, scalar_prefetch = 0 : i64, scratch_operands = 0 : i64, tpu.core_type = #tpu.core_type<tc>, window_params = [{transform_indices = @transform_0, window_bounds = array<i64: 32, 32>}, {pipeline_mode = #tpu.pipeline_mode<synchronous>, transform_indices = @transform_1, window_bounds = array<i64: 32, 256>}, {pipeline_mode = #tpu.pipeline_mode<synchronous>, transform_indices = @transform_2, window_bounds = array<i64: 1, 256>}, {pipeline_mode = #tpu.pipeline_mode<synchronous>, transform_indices = @transform_3, window_bounds = array<i64: 256, 512>}, {pipeline_mode = #tpu.pipeline_mode<synchronous>, transform_indices = @transform_4, window_bounds = array<i64: 1, 512>}, {pipeline_mode = #tpu.pipeline_mode<synchronous>, transform_indices = @transform_5, window_bounds = array<i64: 512, 128>}, {pipeline_mode = #tpu.pipeline_mode<synchronous>, transform_indices = @transform_6, window_bounds = array<i64: 1, 128>}, {transform_indices = @transform_7, window_bounds = array<i64: 32, 128>}]} {
    %c0 = arith.constant 0 : index
    %c0_0 = arith.constant 0 : index
    %0 = vector.load %arg1[%c0, %c0_0] : memref<32x32xbf16, #tpu.memory_space<vmem>>, vector<32x32xbf16>
    %c0_1 = arith.constant 0 : index
    %c0_2 = arith.constant 0 : index
    %1 = vector.load %arg2[%c0_1, %c0_2] : memref<32x256xbf16, #tpu.memory_space<vmem>>, vector<32x256xbf16>
    %cst = arith.constant dense<0.000000e+00> : vector<32x256xf32>
    %2 = tpu.matmul %0, %1, %cst {dimension_numbers = #tpu.dot_dimension_numbers<[1], [0], [0], [1], [0, 0, 1, 1], [], []>} : vector<32x32xbf16>, vector<32x256xbf16>, vector<32x256xf32> -> vector<32x256xf32>
    %c0_3 = arith.constant 0 : index
    %c0_4 = arith.constant 0 : index
    %3 = vector.load %arg3[%c0_3, %c0_4] : memref<1x256xf32, #tpu.memory_space<vmem>>, vector<1x256xf32>
    %4 = vector.broadcast %3 : vector<1x256xf32> to vector<32x256xf32>
    %5 = arith.addf %2, %4 : vector<32x256xf32>
    %cst_5 = arith.constant 0.000000e+00 : f32
    %6 = vector.broadcast %cst_5 : f32 to vector<32x256xf32>
    %7 = arith.maximumf %5, %6 : vector<32x256xf32>
    %8 = arith.truncf %7 : vector<32x256xf32> to vector<32x256xbf16>
    %c0_6 = arith.constant 0 : index
    %c0_7 = arith.constant 0 : index
    %9 = vector.load %arg4[%c0_6, %c0_7] : memref<256x512xbf16, #tpu.memory_space<vmem>>, vector<256x512xbf16>
    %cst_8 = arith.constant dense<0.000000e+00> : vector<32x512xf32>
    %10 = tpu.matmul %8, %9, %cst_8 {dimension_numbers = #tpu.dot_dimension_numbers<[1], [0], [0], [1], [0, 0, 1, 1], [], []>} : vector<32x256xbf16>, vector<256x512xbf16>, vector<32x512xf32> -> vector<32x512xf32>
    %c0_9 = arith.constant 0 : index
    %c0_10 = arith.constant 0 : index
    %11 = vector.load %arg5[%c0_9, %c0_10] : memref<1x512xf32, #tpu.memory_space<vmem>>, vector<1x512xf32>
    %12 = vector.broadcast %11 : vector<1x512xf32> to vector<32x512xf32>
    %13 = arith.addf %10, %12 : vector<32x512xf32>
    %cst_11 = arith.constant 0.000000e+00 : f32
    %14 = vector.broadcast %cst_11 : f32 to vector<32x512xf32>
    %15 = arith.maximumf %13, %14 : vector<32x512xf32>
    %16 = arith.truncf %15 : vector<32x512xf32> to vector<32x512xbf16>
    %c0_12 = arith.constant 0 : index
    %c0_13 = arith.constant 0 : index
    %17 = vector.load %arg6[%c0_12, %c0_13] : memref<512x128xbf16, #tpu.memory_space<vmem>>, vector<512x128xbf16>
    %cst_14 = arith.constant dense<0.000000e+00> : vector<32x128xf32>
    %18 = tpu.matmul %16, %17, %cst_14 {dimension_numbers = #tpu.dot_dimension_numbers<[1], [0], [0], [1], [0, 0, 1, 1], [], []>} : vector<32x512xbf16>, vector<512x128xbf16>, vector<32x128xf32> -> vector<32x128xf32>
    %c0_15 = arith.constant 0 : index
    %c0_16 = arith.constant 0 : index
    %19 = vector.load %arg7[%c0_15, %c0_16] : memref<1x128xf32, #tpu.memory_space<vmem>>, vector<1x128xf32>
    %20 = vector.broadcast %19 : vector<1x128xf32> to vector<32x128xf32>
    %21 = arith.addf %18, %20 : vector<32x128xf32>
    %cst_17 = arith.constant dense<0xFF800000> : vector<32xf32>
    %22 = vector.multi_reduction <maximumf>, %21, %cst_17 [1] : vector<32x128xf32> to vector<32xf32>
    %23 = vector.shape_cast %22 : vector<32xf32> to vector<32x1xf32>
    %24 = vector.broadcast %23 : vector<32x1xf32> to vector<32x128xf32>
    %25 = arith.subf %21, %24 : vector<32x128xf32>
    %26 = math.exp %25 : vector<32x128xf32>
    %cst_18 = arith.constant dense<0.000000e+00> : vector<32xf32>
    %27 = vector.multi_reduction <add>, %26, %cst_18 [1] : vector<32x128xf32> to vector<32xf32>
    %28 = vector.shape_cast %27 : vector<32xf32> to vector<32x1xf32>
    %29 = math.log %28 : vector<32x1xf32>
    %30 = vector.broadcast %29 : vector<32x1xf32> to vector<32x128xf32>
    %31 = arith.subf %25, %30 : vector<32x128xf32>
    %c0_19 = arith.constant 0 : index
    %c0_20 = arith.constant 0 : index
    %32 = vector.load %arg8[%c0_19, %c0_20] : memref<32x128xf32, #tpu.memory_space<vmem>>, vector<32x128xf32>
    tpu.vector_store %arg8[%c0_19, %c0_20], %31 {strides = array<i32>} : memref<32x128xf32, #tpu.memory_space<vmem>>, vector<32x128xf32>,
    return
  }
  func.func @transform_0(%arg0: i32) -> (i32, i32) {
    %c0_i32 = arith.constant 0 : i32
    %c0_i32_0 = arith.constant 0 : i32
    return %arg0, %c0_i32 : i32, i32
  }
  func.func @transform_1(%arg0: i32) -> (i32, i32) {
    %c0_i32 = arith.constant 0 : i32
    %c0_i32_0 = arith.constant 0 : i32
    %c0_i32_1 = arith.constant 0 : i32
    return %c0_i32, %c0_i32_0 : i32, i32
  }
  func.func @transform_2(%arg0: i32) -> (i32, i32) {
    %c0_i32 = arith.constant 0 : i32
    %c0_i32_0 = arith.constant 0 : i32
    %c0_i32_1 = arith.constant 0 : i32
    return %c0_i32, %c0_i32_0 : i32, i32
  }
  func.func @transform_3(%arg0: i32) -> (i32, i32) {
    %c0_i32 = arith.constant 0 : i32
    %c0_i32_0 = arith.constant 0 : i32
    %c0_i32_1 = arith.constant 0 : i32
    return %c0_i32, %c0_i32_0 : i32, i32
  }
  func.func @transform_4(%arg0: i32) -> (i32, i32) {
    %c0_i32 = arith.constant 0 : i32
    %c0_i32_0 = arith.constant 0 : i32
    %c0_i32_1 = arith.constant 0 : i32
    return %c0_i32, %c0_i32_0 : i32, i32
  }
  func.func @transform_5(%arg0: i32) -> (i32, i32) {
    %c0_i32 = arith.constant 0 : i32
    %c0_i32_0 = arith.constant 0 : i32
    %c0_i32_1 = arith.constant 0 : i32
    return %c0_i32, %c0_i32_0 : i32, i32
  }
  func.func @transform_6(%arg0: i32) -> (i32, i32) {
    %c0_i32 = arith.constant 0 : i32
    %c0_i32_0 = arith.constant 0 : i32
    %c0_i32_1 = arith.constant 0 : i32
    return %c0_i32, %c0_i32_0 : i32, i32
  }
  func.func @transform_7(%arg0: i32) -> (i32, i32) {
    %c0_i32 = arith.constant 0 : i32
    %c0_i32_0 = arith.constant 0 : i32
    return %arg0, %c0_i32 : i32, i32
  }
}

</mosaic_0001>

<llo_original>
// kernel: vec_classifier.1
$region0: #{vec_classifier.1}
  #allocation0 [shape = 'u32[]', space=smem, size = 0x4, offset = 0x4, fixed_abs, tag = 'smem constant byte address 0x4 - core index']
  #allocation1 [shape = 'u32[144,128]{1,0:T(1,128)}', space=vmem, size = 0x12000, scoped, tag = 'internal scratch']
  %s0 = inlined_call_operand.vmem [shape: bf16[64,32], index: 0, kind: input, shape index: {}]
  %s1 = inlined_call_operand.vmem [shape: bf16[32,256], index: 1, kind: input, shape index: {}]
  %s2 = inlined_call_operand.vmem [shape: f32[1,256], index: 2, kind: input, shape index: {}]
  %s3 = inlined_call_operand.vmem [shape: bf16[256,512], index: 3, kind: input, shape index: {}]
  %s4 = inlined_call_operand.vmem [shape: f32[1,512], index: 4, kind: input, shape index: {}]
  %s5 = inlined_call_operand.vmem [shape: bf16[512,128], index: 5, kind: input, shape index: {}]
  %s6 = inlined_call_operand.vmem [shape: f32[1,128], index: 6, kind: input, shape index: {}]
  %s7 = inlined_call_operand.vmem [shape: f32[64,128], index: 7, kind: output, shape index: {}]
  %s8 = sld [smem:[#allocation0]]
  $region61: #{vec_classifier.1} parent=0
    _
  %s10 = ssub.s32 1, %s8
  %s11 = scalar_select 0, %s10, %s8
  loop: start=0, step=1, limit=4
  $region2: #{vec_classifier.1} parent=0 // loop_pre_header
    _
  $region3: #{vec_classifier.1} parent=0 // loop_header
    %s13 = sphi 0, %s17
    %p14 = scmp.ge.s32.totalorder %s13, 4
    %s23 = sphi 0, %s25
    %s26 = sphi 0, %s23
    %s27 = sphi 0, %s26
    %s43 = sphi 0, %s27
    %s47 = sphi 0, %s47
    %s49 = sphi 0, %s47
    %s50 = sphi 0, %s49
    %s64 = sphi 0, %s50
    %s68 = sphi 0, %s68
    %s70 = sphi 0, %s68
    %s71 = sphi 0, %s70
    %s85 = sphi 0, %s71
    %s89 = sphi 0, %s89
    %s91 = sphi 0, %s89
    %s92 = sphi 0, %s91
    %s106 = sphi 0, %s92
    %s110 = sphi 0, %s110
    %s112 = sphi 0, %s110
    %s113 = sphi 0, %s112
    %s127 = sphi 0, %s113
    %s131 = sphi 0, %s131
    %s133 = sphi 0, %s131
    %s134 = sphi 0, %s133
    %s148 = sphi 0, %s134
    %s152 = sphi 0, %s152
    %s154 = sphi 0, %s152
    %s155 = sphi 0, %s154
    %s169 = sphi 0, %s155
    %s175 = sphi 0, %s177
    %s178 = sphi 0, %s175
    %s179 = sphi 0, %s178
    %s195 = sphi 0, %s179
  $region4: #{vec_classifier.1} parent=0 // loop_header_branch
    %16 = sbr.rel (%p14) target = $region8
  $region5: #{vec_classifier.1} parent=0 // loop_body
    %s18 = ssub.s32 %s13, 1
    %s19 = ssub.s32 %s13, 2
    %s20 = sadd.s32 %s13, 1
    %s21 = ssub.s32 %s13, %s20
    %p22 = scmp.eq.s32.totalorder %s21, 0
    %s24 = sadd.s32 %s23, 1
    %s25 = scalar_select %p22, %s23, %s24
    %p28 = pneg %p22
    %p29 = scmp.eq.s32.totalorder %s13, 1
    %p30 = por %p28, %p29
    %p31 = scmp.ne.s32.totalorder %s23, %s26
    %p32 = scmp.eq.s32.totalorder %s13, 0
    %p33 = por %p31, %p32
    %p34 = scmp.ne.s32.totalorder %s23, %s26
    %p35 = scmp.eq.s32.totalorder %s18, 1
    %p36 = por %p34, %p35
    %p37 = scmp.ne.s32.totalorder %s26, %s27
    %p38 = scmp.eq.s32.totalorder %s18, 0
    %p39 = por %p37, %p38
    %p40 = scmp.ne.s32.totalorder %s26, %s27
    %p41 = scmp.eq.s32.totalorder %s19, 1
    %p42 = por %p40, %p41
    %p44 = scmp.ne.s32.totalorder %s27, %s43
    %p45 = scmp.eq.s32.totalorder %s19, 0
    %p46 = por %p44, %p45
    %s48 = sadd.s32 %s47, 1
    %p51 = scmp.eq.s32.totalorder %s13, 1
    %p52 = scmp.ne.s32.totalorder %s47, %s49
    %p53 = scmp.eq.s32.totalorder %s13, 0
    %p54 = por %p52, %p53
    %p55 = scmp.ne.s32.totalorder %s47, %s49
    %p56 = scmp.eq.s32.totalorder %s18, 1
    %p57 = por %p55, %p56
    %p58 = scmp.ne.s32.totalorder %s49, %s50
    %p59 = scmp.eq.s32.totalorder %s18, 0
    %p60 = por %p58, %p59
    %p61 = scmp.ne.s32.totalorder %s49, %s50
    %p62 = scmp.eq.s32.totalorder %s19, 1
    %p63 = por %p61, %p62
    %p65 = scmp.ne.s32.totalorder %s50, %s64
    %p66 = scmp.eq.s32.totalorder %s19, 0
    %p67 = por %p65, %p66
    %s69 = sadd.s32 %s68, 1
    %p72 = scmp.eq.s32.totalorder %s13, 1
    %p73 = scmp.ne.s32.totalorder %s68, %s70
    %p74 = scmp.eq.s32.totalorder %s13, 0
    %p75 = por %p73, %p74
    %p76 = scmp.ne.s32.totalorder %s68, %s70
    %p77 = scmp.eq.s32.totalorder %s18, 1
    %p78 = por %p76, %p77
    %p79 = scmp.ne.s32.totalorder %s70, %s71
    %p80 = scmp.eq.s32.totalorder %s18, 0
    %p81 = por %p79, %p80
    %p82 = scmp.ne.s32.totalorder %s70, %s71
    %p83 = scmp.eq.s32.totalorder %s19, 1
    %p84 = por %p82, %p83
    %p86 = scmp.ne.s32.totalorder %s71, %s85
    %p87 = scmp.eq.s32.totalorder %s19, 0
    %p88 = por %p86, %p87
    %s90 = sadd.s32 %s89, 1
    %p93 = scmp.eq.s32.totalorder %s13, 1
    %p94 = scmp.ne.s32.totalorder %s89, %s91
    %p95 = scmp.eq.s32.totalorder %s13, 0
    %p96 = por %p94, %p95
    %p97 = scmp.ne.s32.totalorder %s89, %s91
    %p98 = scmp.eq.s32.totalorder %s18, 1
    %p99 = por %p97, %p98
    %p100 = scmp.ne.s32.totalorder %s91, %s92
    %p101 = scmp.eq.s32.totalorder %s18, 0
    %p102 = por %p100, %p101
    %p103 = scmp.ne.s32.totalorder %s91, %s92
    %p104 = scmp.eq.s32.totalorder %s19, 1
    %p105 = por %p103, %p104
    %p107 = scmp.ne.s32.totalorder %s92, %s106
    %p108 = scmp.eq.s32.totalorder %s19, 0
    %p109 = por %p107, %p108
    %s111 = sadd.s32 %s110, 1
    %p114 = scmp.eq.s32.totalorder %s13, 1
    %p115 = scmp.ne.s32.totalorder %s110, %s112
    %p116 = scmp.eq.s32.totalorder %s13, 0
    %p117 = por %p115, %p116
    %p118 = scmp.ne.s32.totalorder %s110, %s112
    %p119 = scmp.eq.s32.totalorder %s18, 1
    %p120 = por %p118, %p119
    %p121 = scmp.ne.s32.totalorder %s112, %s113
    %p122 = scmp.eq.s32.totalorder %s18, 0
    %p123 = por %p121, %p122
    %p124 = scmp.ne.s32.totalorder %s112, %s113
    %p125 = scmp.eq.s32.totalorder %s19, 1
    %p126 = por %p124, %p125
    %p128 = scmp.ne.s32.totalorder %s113, %s127
    %p129 = scmp.eq.s32.totalorder %s19, 0
    %p130 = por %p128, %p129
    %s132 = sadd.s32 %s131, 1
    %p135 = scmp.eq.s32.totalorder %s13, 1
    %p136 = scmp.ne.s32.totalorder %s131, %s133
    %p137 = scmp.eq.s32.totalorder %s13, 0
    %p138 = por %p136, %p137
    %p139 = scmp.ne.s32.totalorder %s131, %s133
    %p140 = scmp.eq.s32.totalorder %s18, 1
    %p141 = por %p139, %p140
    %p142 = scmp.ne.s32.totalorder %s133, %s134
    %p143 = scmp.eq.s32.totalorder %s18, 0
    %p144 = por %p142, %p143
    %p145 = scmp.ne.s32.totalorder %s133, %s134
    %p146 = scmp.eq.s32.totalorder %s19, 1
    %p147 = por %p145, %p146
    %p149 = scmp.ne.s32.totalorder %s134, %s148
    %p150 = scmp.eq.s32.totalorder %s19, 0
    %p151 = por %p149, %p150
    %s153 = sadd.s32 %s152, 1
    %p156 = scmp.eq.s32.totalorder %s13, 1
    %p157 = scmp.ne.s32.totalorder %s152, %s154
    %p158 = scmp.eq.s32.totalorder %s13, 0
    %p159 = por %p157, %p158
    %p160 = scmp.ne.s32.totalorder %s152, %s154
    %p161 = scmp.eq.s32.totalorder %s18, 1
    %p162 = por %p160, %p161
    %p163 = scmp.ne.s32.totalorder %s154, %s155
    %p164 = scmp.eq.s32.totalorder %s18, 0
    %p165 = por %p163, %p164
    %p166 = scmp.ne.s32.totalorder %s154, %s155
    %p167 = scmp.eq.s32.totalorder %s19, 1
    %p168 = por %p166, %p167
    %p170 = scmp.ne.s32.totalorder %s155, %s169
    %p171 = scmp.eq.s32.totalorder %s19, 0
    %p172 = por %p170, %p171
    %s173 = ssub.s32 %s13, %s20
    %p174 = scmp.eq.s32.totalorder %s173, 0
    %s176 = sadd.s32 %s175, 1
    %s177 = scalar_select %p174, %s175, %s176
    %p180 = pneg %p174
    %p181 = scmp.eq.s32.totalorder %s13, 1
    %p182 = por %p180, %p181
    %p183 = scmp.ne.s32.totalorder %s175, %s178
    %p184 = scmp.eq.s32.totalorder %s13, 0
    %p185 = por %p183, %p184
    %p186 = scmp.ne.s32.totalorder %s175, %s178
    %p187 = scmp.eq.s32.totalorder %s18, 1
    %p188 = por %p186, %p187
    %p189 = scmp.ne.s32.totalorder %s178, %s179
    %p190 = scmp.eq.s32.totalorder %s18, 0
    %p191 = por %p189, %p190
    %p192 = scmp.ne.s32.totalorder %s178, %s179
    %p193 = scmp.eq.s32.totalorder %s19, 1
    %p194 = por %p192, %p193
    %p196 = scmp.ne.s32.totalorder %s179, %s195
    %p197 = scmp.eq.s32.totalorder %s19, 0
    %p198 = por %p196, %p197
    %p199 = scmp.le.s32.totalorder 1, %s13
    %p200 = scmp.lt.s32.totalorder %s13, 3
    %p201 = pnand %p199, %p200
    %p202 = pneg %p201
    // Predicated region
    $region9: #{vec_classifier.1} parent=5 // pred_check
      _
    $region10: #{vec_classifier.1} parent=5 // pred_check_branch
      %204 = sbr.rel (%p201) target = $region12
    $region11: #{vec_classifier.1} parent=5 // pred_region
      %s205 = ssub.s32 %s13, 1
      // Predicated region
      $region13: #{vec_classifier.1} parent=11 // pred_check
        %p206 = pneg %p60
      $region14: #{vec_classifier.1} parent=11 // pred_check_branch
        %208 = sbr.rel (%p206) target = $region16
      $region15: #{vec_classifier.1} parent=11 // pred_region
        _
      $region16: #{vec_classifier.1} parent=11 // pred_fallthru
        _
      // Predicated region
      $region17: #{vec_classifier.1} parent=11 // pred_check
        %p209 = pneg %p81
      $region18: #{vec_classifier.1} parent=11 // pred_check_branch
        %211 = sbr.rel (%p209) target = $region20
      $region19: #{vec_classifier.1} parent=11 // pred_region
        _
      $region20: #{vec_classifier.1} parent=11 // pred_fallthru
        _
      // Predicated region
      $region21: #{vec_classifier.1} parent=11 // pred_check
        %p212 = pneg %p102
      $region22: #{vec_classifier.1} parent=11 // pred_check_branch
        %214 = sbr.rel (%p212) target = $region24
      $region23: #{vec_classifier.1} parent=11 // pred_region
        _
      $region24: #{vec_classifier.1} parent=11 // pred_fallthru
        _
      // Predicated region
      $region25: #{vec_classifier.1} parent=11 // pred_check
        %p215 = pneg %p123
      $region26: #{vec_classifier.1} parent=11 // pred_check_branch
        %217 = sbr.rel (%p215) target = $region28
      $region27: #{vec_classifier.1} parent=11 // pred_region
        _
      $region28: #{vec_classifier.1} parent=11 // pred_fallthru
        _
      // Predicated region
      $region29: #{vec_classifier.1} parent=11 // pred_check
        %p218 = pneg %p144
      $region30: #{vec_classifier.1} parent=11 // pred_check_branch
        %220 = sbr.rel (%p218) target = $region32
      $region31: #{vec_classifier.1} parent=11 // pred_region
        _
      $region32: #{vec_classifier.1} parent=11 // pred_fallthru
        _
      // Predicated region
      $region33: #{vec_classifier.1} parent=11 // pred_check
        %p221 = pneg %p165
      $region34: #{vec_classifier.1} parent=11 // pred_check_branch
        %223 = sbr.rel (%p221) target = $region36
      $region35: #{vec_classifier.1} parent=11 // pred_region
        _
      $region36: #{vec_classifier.1} parent=11 // pred_fallthru
        _
    $region12: #{vec_classifier.1} parent=5 // pred_fallthru
      _
    %p224 = scmp.lt.s32.totalorder %s13, 2
    // Predicated region
    $region37: #{vec_classifier.1} parent=5 // pred_check
      %p225 = pneg %p224
    $region38: #{vec_classifier.1} parent=5 // pred_check_branch
      %227 = sbr.rel (%p225) target = $region40
    $region39: #{vec_classifier.1} parent=5 // pred_region
      // Predicated region
      $region41: #{vec_classifier.1} parent=39 // pred_check
        %p228 = pneg %p33
      $region42: #{vec_classifier.1} parent=39 // pred_check_branch
        %230 = sbr.rel (%p228) target = $region44
      $region43: #{vec_classifier.1} parent=39 // pred_region
        %s231 = smul.u32 4, %s13
        %p232 = scmp.lt.s32.totalorder %s231, 7
        %s233 = scalar_select %p232, %s231, 7
        %s234 = smul.addr %s233, 4
        %s235 = scalar_lea.vmem %s0, %s234
        %s236 = smul.u32 4, %s13
      $region44: #{vec_classifier.1} parent=39 // pred_fallthru
        _
    $region40: #{vec_classifier.1} parent=5 // pred_fallthru
      _
    %p237 = scmp.le.s32.totalorder 1, %s13
    %p238 = scmp.lt.s32.totalorder %s13, 3
    %p239 = pnand %p237, %p238
    %p240 = pneg %p239
    // Predicated region
    $region45: #{vec_classifier.1} parent=5 // pred_check
      _
    $region46: #{vec_classifier.1} parent=5 // pred_check_branch
      %242 = sbr.rel (%p239) target = $region48
    $region47: #{vec_classifier.1} parent=5 // pred_region
      %s243 = ssub.s32 %s13, 1
      %s244 = smul.u32 4, %s18
      %p245 = scmp.lt.s32.totalorder %s244, 7
      %s246 = scalar_select %p245, %s244, 7
      %s247 = smul.addr %s246, 4
      %s248 = scalar_lea.vmem %s0, %s247
      %p249 = pneg %p39
      %p250 = pneg %p36
      %p251 = pneg %p60
      %p252 = pneg %p57
      %p253 = pneg %p81
      %p254 = pneg %p78
      %p255 = pneg %p102
      %p256 = pneg %p99
      %p257 = pneg %p123
      %p258 = pneg %p120
      %p259 = pneg %p144
      %p260 = pneg %p141
      %p261 = pneg %p165
      %p262 = pneg %p162
      %p263 = pneg %p191
      %p264 = pneg %p188
      %s265 = smul.u32 4, %s18
      %p266 = scmp.lt.s32.totalorder %s265, 7
      %s267 = scalar_select %p266, %s265, 7
      %s268 = smul.addr %s267, 8
      %s269 = scalar_lea.vmem %s7, %s268
      %s270 = smul.u32 4, %s18
      %p271 = scmp.lt.s32.totalorder %s270, 7
      %s272 = scalar_select %p271, %s270, 7
      %s273 = smul.addr %s272, 4
      %s274 = scalar_lea.vmem %s0, %s273
      %s275 = smul.u32 4, %s18
      %s276 = smul.u32 4, %s18
      %p277 = scmp.lt.s32.totalorder %s276, 7
      %s278 = scalar_select %p277, %s276, 7
      %s279 = smul.addr %s278, 8
      %s280 = scalar_lea.vmem %s7, %s279
      %s281 = smul.u32 4, %s18
      %v283 = vld [vmem:[%s274] sm:$0xf]
      %v284 = vld [vmem:[%s274 + $0x4] sm:$0xf]
      %v285 = vld [vmem:[%s274 + $0x8] sm:$0xf]
      %v286 = vld [vmem:[%s274 + $0xc] sm:$0xf]
      %v287 = vld [vmem:[%s1] sm:$0xff]
      %v288 = vld [vmem:[%s1 + $0x8] sm:$0xff]
      %v289 = vld [vmem:[%s1 + $0x10] sm:$0xff]
      %v290 = vld [vmem:[%s1 + $0x18] sm:$0xff]
      %v291 = vld [vmem:[%s2] sm:$0x3]
      %v293 = vlaneseq
      %v294 = vshrl.u32 %v293, 7
      %v295 = vsub.s32 0, %v294
      %v296 = vrot.slane %v291, %v295
      %v297 = vlaneseq
      %v298 = vshrl.u32 %v297, 7
      %v299 = vsub.s32 1, %v298
      %v300 = vrot.slane %v291, %v299
      %v307 = vunpack.c.l.b16 %v283
      %v308 = vunpack.c.l.b16 %v284
      %v309 = vunpack.c.l.b16 %v285
      %v310 = vunpack.c.l.b16 %v286
      %v311 = vpack.c.b16 %v308, %v307
      %v312 = vpack.c.b16 %v310, %v309
      %v317 = vunpack.c.l.b16 %v287
      %v318 = vunpack.c.h.b16 %v287
      %v319 = vunpack.c.l.b16 %v288
      %v320 = vunpack.c.h.b16 %v288
      %v321 = vunpack.c.l.b16 %v289
      %v322 = vunpack.c.h.b16 %v289
      %v323 = vunpack.c.l.b16 %v290
      %v324 = vunpack.c.h.b16 %v290
      %v325 = vpack.c.b16 %v319, %v317
      %v326 = vpack.c.b16 %v320, %v318
      %v327 = vpack.c.b16 %v323, %v321
      %v328 = vpack.c.b16 %v324, %v322
      %vm333 = vcmask 261120
      %v335 = vsel %vm333, %v311, 0
      %v338 = vsel %vm333, %v312, 0
      %340 = vmatprep.subr.bf16.mxu0 %v326
      %341 = vmatpush1.bf16.msra.mxu0 %v325
      %342 = vmatprep.subr.bf16.mxu0 %v328
      %343 = vmatpush1.bf16.msra.mxu0 %v327
      %344 = vmatprep.subr.bf16.mxu0 0
      %345 = vmatpush1.bf16.msra.mxu0 0
      %346 = vmatprep.subr.bf16.mxu0 0
      %347 = vmatpush1.bf16.msra.mxu0 0
      %348 = vmatprep.subr.bf16.mxu0 0
      %349 = vmatpush1.bf16.msra.mxu0 0
      %350 = vmatprep.subr.bf16.mxu0 0
      %351 = vmatpush1.bf16.msra.mxu0 0
      %352 = vmatprep.subr.bf16.mxu0 0
      %353 = vmatpush1.bf16.msra.mxu0 0
      %354 = vmatprep.subr.bf16.mxu0 0
      %355 = vmatpush1.bf16.msra.mxu0 0
      %356 = vmatprep.subr.bf16.mxu0 0
      %357 = vmatpush1.bf16.msra.mxu0 0
      %358 = vmatprep.subr.bf16.mxu0 0
      %359 = vmatpush1.bf16.msra.mxu0 0
      %360 = vmatprep.subr.bf16.mxu0 0
      %361 = vmatpush1.bf16.msra.mxu0 0
      %362 = vmatprep.subr.bf16.mxu0 0
      %363 = vmatpush1.bf16.msra.mxu0 0
      %364 = vmatprep.subr.bf16.mxu0 0
      %365 = vmatpush1.bf16.msra.mxu0 0
      %366 = vmatprep.subr.bf16.mxu0 0
      %367 = vmatpush1.bf16.msra.mxu0 0
      %368 = vmatprep.subr.bf16.mxu0 0
      %369 = vmatpush1.bf16.msra.mxu0 0
      %370 = vmatprep.subr.bf16.mxu0 0
      %371 = vmatpush1.bf16.msra.mxu0 0
      %372 = vmatprep.mubr.bf16.mxu0 0
      %373 = vmatmul.mubr.bf16.gmra.mrb[0].mxu0 %v335
      %v374 = vpop.f32.mrb[0].mxu0
      %v375 = vadd.f32 %v296, %v374
      %v376 = vpop.f32.mrb[0].mxu0
      %v377 = vadd.f32 %v300, %v376
      %v378 = vpop.f32.mrb[0].mxu0
      %v379 = vadd.f32 %v296, %v378
      %v380 = vpop.f32.mrb[0].mxu0
      %v381 = vadd.f32 %v300, %v380
      %382 = vmatprep.mubr.bf16.mxu0 0
      %383 = vmatmul.mubr.bf16.gmra.mrb[0].mxu0 %v338
      %v384 = vpop.f32.mrb[0].mxu0
      %v385 = vadd.f32 %v296, %v384
      %v386 = vpop.f32.mrb[0].mxu0
      %v387 = vadd.f32 %v300, %v386
      %v388 = vpop.f32.mrb[0].mxu0
      %v389 = vadd.f32 %v296, %v388
      %v390 = vpop.f32.mrb[0].mxu0
      %v391 = vadd.f32 %v300, %v390
      %392 = vdwg.mxu0
      %v393 = vmax.f32 %v375, 0.0
      %v394 = vmax.f32 %v377, 0.0
      %v395 = vmax.f32 %v379, 0.0
      %v396 = vmax.f32 %v381, 0.0
      %v397 = vmax.f32 %v385, 0.0
      %v398 = vmax.f32 %v387, 0.0
      %v399 = vmax.f32 %v389, 0.0
      %v400 = vmax.f32 %v391, 0.0
      %v401 = vpack.c.bf16 %v395, %v393
      %v402 = vpack.c.bf16 %v396, %v394
      %v403 = vpack.c.bf16 %v399, %v397
      %v404 = vpack.c.bf16 %v400, %v398
      %v405 = vld [vmem:[%s3] sm:$0xff]
      %v406 = vld [vmem:[%s3 + $0x8] sm:$0xff]
      %v407 = vld [vmem:[%s3 + $0x10] sm:$0xff]
      %v408 = vld [vmem:[%s3 + $0x18] sm:$0xff]
      %v409 = vld [vmem:[%s3 + $0x20] sm:$0xff]
      %v410 = vld [vmem:[%s3 + $0x28] sm:$0xff]
      %v411 = vld [vmem:[%s3 + $0x30] sm:$0xff]
      %v412 = vld [vmem:[%s3 + $0x38] sm:$0xff]
      %v413 = vld [vmem:[%s3 + $0x40] sm:$0xff]
      %v414 = vld [vmem:[%s3 + $0x48] sm:$0xff]
      %v415 = vld [vmem:[%s3 + $0x50] sm:$0xff]
      %v416 = vld [vmem:[%s3 + $0x58] sm:$0xff]
      %v417 = vld [vmem:[%s3 + $0x60] sm:$0xff]
      %v418 = vld [vmem:[%s3 + $0x68] sm:$0xff]
      %v419 = vld [vmem:[%s3 + $0x70] sm:$0xff]
      %v420 = vld [vmem:[%s3 + $0x78] sm:$0xff]
      %v421 = vld [vmem:[%s3 + $0x80] sm:$0xff]
      %v422 = vld [vmem:[%s3 + $0x88] sm:$0xff]
      %v423 = vld [vmem:[%s3 + $0x90] sm:$0xff]
      %v424 = vld [vmem:[%s3 + $0x98] sm:$0xff]
      %v425 = vld [vmem:[%s3 + $0xa0] sm:$0xff]
      %v426 = vld [vmem:[%s3 + $0xa8] sm:$0xff]
      %v427 = vld [vmem:[%s3 + $0xb0] sm:$0xff]
      %v428 = vld [vmem:[%s3 + $0xb8] sm:$0xff]
      %v429 = vld [vmem:[%s3 + $0xc0] sm:$0xff]
      %v430 = vld [vmem:[%s3 + $0xc8] sm:$0xff]
      %v431 = vld [vmem:[%s3 + $0xd0] sm:$0xff]
      %v432 = vld [vmem:[%s3 + $0xd8] sm:$0xff]
      %v433 = vld [vmem:[%s3 + $0xe0] sm:$0xff]
      %v434 = vld [vmem:[%s3 + $0xe8] sm:$0xff]
      %v435 = vld [vmem:[%s3 + $0xf0] sm:$0xff]
      %v436 = vld [vmem:[%s3 + $0xf8] sm:$0xff]
      %v437 = vld [vmem:[%s3 + $0x100] sm:$0xff]
      %v438 = vld [vmem:[%s3 + $0x108] sm:$0xff]
      %v439 = vld [vmem:[%s3 + $0x110] sm:$0xff]
      %v440 = vld [vmem:[%s3 + $0x118] sm:$0xff]
      %v441 = vld [vmem:[%s3 + $0x120] sm:$0xff]
      %v442 = vld [vmem:[%s3 + $0x128] sm:$0xff]
      %v443 = vld [vmem:[%s3 + $0x130] sm:$0xff]
      %v444 = vld [vmem:[%s3 + $0x138] sm:$0xff]
      %v445 = vld [vmem:[%s3 + $0x140] sm:$0xff]
      %v446 = vld [vmem:[%s3 + $0x148] sm:$0xff]
      %v447 = vld [vmem:[%s3 + $0x150] sm:$0xff]
      %v448 = vld [vmem:[%s3 + $0x158] sm:$0xff]
      %v449 = vld [vmem:[%s3 + $0x160] sm:$0xff]
      %v450 = vld [vmem:[%s3 + $0x168] sm:$0xff]
      %v451 = vld [vmem:[%s3 + $0x170] sm:$0xff]
      %v452 = vld [vmem:[%s3 + $0x178] sm:$0xff]
      %v453 = vld [vmem:[%s3 + $0x180] sm:$0xff]
      %v454 = vld [vmem:[%s3 + $0x188] sm:$0xff]
      %v455 = vld [vmem:[%s3 + $0x190] sm:$0xff]
      %v456 = vld [vmem:[%s3 + $0x198] sm:$0xff]
      %v457 = vld [vmem:[%s3 + $0x1a0] sm:$0xff]
      %v458 = vld [vmem:[%s3 + $0x1a8] sm:$0xff]
      %v459 = vld [vmem:[%s3 + $0x1b0] sm:$0xff]
      %v460 = vld [vmem:[%s3 + $0x1b8] sm:$0xff]
      %v461 = vld [vmem:[%s3 + $0x1c0] sm:$0xff]
      %v462 = vld [vmem:[%s3 + $0x1c8] sm:$0xff]
      %v463 = vld [vmem:[%s3 + $0x1d0] sm:$0xff]
      %v464 = vld [vmem:[%s3 + $0x1d8] sm:$0xff]
      %v465 = vld [vmem:[%s3 + $0x1e0] sm:$0xff]
      %v466 = vld [vmem:[%s3 + $0x1e8] sm:$0xff]
      %v467 = vld [vmem:[%s3 + $0x1f0] sm:$0xff]
      %v468 = vld [vmem:[%s3 + $0x1f8] sm:$0xff]
      %v469 = vld [vmem:[%s4] sm:$0xf]
      %v471 = vlaneseq
      %v472 = vshrl.u32 %v471, 7
      %v473 = vsub.s32 0, %v472
      %v474 = vrot.slane %v469, %v473
      %v475 = vlaneseq
      %v476 = vshrl.u32 %v475, 7
      %v477 = vsub.s32 1, %v476
      %v478 = vrot.slane %v469, %v477
      %v479 = vlaneseq
      %v480 = vshrl.u32 %v479, 7
      %v481 = vsub.s32 2, %v480
      %v482 = vrot.slane %v469, %v481
      %v483 = vlaneseq
      %v484 = vshrl.u32 %v483, 7
      %v485 = vsub.s32 3, %v484
      %v486 = vrot.slane %v469, %v485
      %v555 = vunpack.c.l.b16 %v405
      %v556 = vunpack.c.h.b16 %v405
      %v557 = vunpack.c.l.b16 %v406
      %v558 = vunpack.c.h.b16 %v406
      %v559 = vunpack.c.l.b16 %v407
      %v560 = vunpack.c.h.b16 %v407
      %v561 = vunpack.c.l.b16 %v408
      %v562 = vunpack.c.h.b16 %v408
      %v563 = vunpack.c.l.b16 %v409
      %v564 = vunpack.c.h.b16 %v409
      %v565 = vunpack.c.l.b16 %v410
      %v566 = vunpack.c.h.b16 %v410
      %v567 = vunpack.c.l.b16 %v411
      %v568 = vunpack.c.h.b16 %v411
      %v569 = vunpack.c.l.b16 %v412
      %v570 = vunpack.c.h.b16 %v412
      %v571 = vunpack.c.l.b16 %v413
      %v572 = vunpack.c.h.b16 %v413
      %v573 = vunpack.c.l.b16 %v414
      %v574 = vunpack.c.h.b16 %v414
      %v575 = vunpack.c.l.b16 %v415
      %v576 = vunpack.c.h.b16 %v415
      %v577 = vunpack.c.l.b16 %v416
      %v578 = vunpack.c.h.b16 %v416
      %v579 = vunpack.c.l.b16 %v417
      %v580 = vunpack.c.h.b16 %v417
      %v581 = vunpack.c.l.b16 %v418
      %v582 = vunpack.c.h.b16 %v418
      %v583 = vunpack.c.l.b16 %v419
      %v584 = vunpack.c.h.b16 %v419
      %v585 = vunpack.c.l.b16 %v420
      %v586 = vunpack.c.h.b16 %v420
      %v587 = vunpack.c.l.b16 %v421
      %v588 = vunpack.c.h.b16 %v421
      %v589 = vunpack.c.l.b16 %v422
      %v590 = vunpack.c.h.b16 %v422
      %v591 = vunpack.c.l.b16 %v423
      %v592 = vunpack.c.h.b16 %v423
      %v593 = vunpack.c.l.b16 %v424
      %v594 = vunpack.c.h.b16 %v424
      %v595 = vunpack.c.l.b16 %v425
      %v596 = vunpack.c.h.b16 %v425
      %v597 = vunpack.c.l.b16 %v426
      %v598 = vunpack.c.h.b16 %v426
      %v599 = vunpack.c.l.b16 %v427
      %v600 = vunpack.c.h.b16 %v427
      %v601 = vunpack.c.l.b16 %v428
      %v602 = vunpack.c.h.b16 %v428
      %v603 = vunpack.c.l.b16 %v429
      %v604 = vunpack.c.h.b16 %v429
      %v605 = vunpack.c.l.b16 %v430
      %v606 = vunpack.c.h.b16 %v430
      %v607 = vunpack.c.l.b16 %v431
      %v608 = vunpack.c.h.b16 %v431
      %v609 = vunpack.c.l.b16 %v432
      %v610 = vunpack.c.h.b16 %v432
      %v611 = vunpack.c.l.b16 %v433
      %v612 = vunpack.c.h.b16 %v433
      %v613 = vunpack.c.l.b16 %v434
      %v614 = vunpack.c.h.b16 %v434
      %v615 = vunpack.c.l.b16 %v435
      %v616 = vunpack.c.h.b16 %v435
      %v617 = vunpack.c.l.b16 %v436
      %v618 = vunpack.c.h.b16 %v436
      %v619 = vunpack.c.l.b16 %v437
      %v620 = vunpack.c.h.b16 %v437
      %v621 = vunpack.c.l.b16 %v438
      %v622 = vunpack.c.h.b16 %v438
      %v623 = vunpack.c.l.b16 %v439
      %v624 = vunpack.c.h.b16 %v439
      %v625 = vunpack.c.l.b16 %v440
      %v626 = vunpack.c.h.b16 %v440
      %v627 = vunpack.c.l.b16 %v441
      %v628 = vunpack.c.h.b16 %v441
      %v629 = vunpack.c.l.b16 %v442
      %v630 = vunpack.c.h.b16 %v442
      %v631 = vunpack.c.l.b16 %v443
      %v632 = vunpack.c.h.b16 %v443
      %v633 = vunpack.c.l.b16 %v444
      %v634 = vunpack.c.h.b16 %v444
      %v635 = vunpack.c.l.b16 %v445
      %v636 = vunpack.c.h.b16 %v445
      %v637 = vunpack.c.l.b16 %v446
      %v638 = vunpack.c.h.b16 %v446
      %v639 = vunpack.c.l.b16 %v447
      %v640 = vunpack.c.h.b16 %v447
      %v641 = vunpack.c.l.b16 %v448
      %v642 = vunpack.c.h.b16 %v448
      %v643 = vunpack.c.l.b16 %v449
      %v644 = vunpack.c.h.b16 %v449
      %v645 = vunpack.c.l.b16 %v450
      %v646 = vunpack.c.h.b16 %v450
      %v647 = vunpack.c.l.b16 %v451
      %v648 = vunpack.c.h.b16 %v451
      %v649 = vunpack.c.l.b16 %v452
      %v650 = vunpack.c.h.b16 %v452
      %v651 = vunpack.c.l.b16 %v453
      %v652 = vunpack.c.h.b16 %v453
      %v653 = vunpack.c.l.b16 %v454
      %v654 = vunpack.c.h.b16 %v454
      %v655 = vunpack.c.l.b16 %v455
      %v656 = vunpack.c.h.b16 %v455
      %v657 = vunpack.c.l.b16 %v456
      %v658 = vunpack.c.h.b16 %v456
      %v659 = vunpack.c.l.b16 %v457
      %v660 = vunpack.c.h.b16 %v457
      %v661 = vunpack.c.l.b16 %v458
      %v662 = vunpack.c.h.b16 %v458
      %v663 = vunpack.c.l.b16 %v459
      %v664 = vunpack.c.h.b16 %v459
      %v665 = vunpack.c.l.b16 %v460
      %v666 = vunpack.c.h.b16 %v460
      %v667 = vunpack.c.l.b16 %v461
      %v668 = vunpack.c.h.b16 %v461
      %v669 = vunpack.c.l.b16 %v462
      %v670 = vunpack.c.h.b16 %v462
      %v671 = vunpack.c.l.b16 %v463
      %v672 = vunpack.c.h.b16 %v463
      %v673 = vunpack.c.l.b16 %v464
      %v674 = vunpack.c.h.b16 %v464
      %v675 = vunpack.c.l.b16 %v465
      %v676 = vunpack.c.h.b16 %v465
      %v677 = vunpack.c.l.b16 %v466
      %v678 = vunpack.c.h.b16 %v466
      %v679 = vunpack.c.l.b16 %v467
      %v680 = vunpack.c.h.b16 %v467
      %v681 = vunpack.c.l.b16 %v468
      %v682 = vunpack.c.h.b16 %v468
      %v683 = vpack.c.b16 %v559, %v555
      %v684 = vpack.c.b16 %v560, %v556
      %v685 = vpack.c.b16 %v561, %v557
      %v686 = vpack.c.b16 %v562, %v558
      %v687 = vpack.c.b16 %v567, %v563
      %v688 = vpack.c.b16 %v568, %v564
      %v689 = vpack.c.b16 %v569, %v565
      %v690 = vpack.c.b16 %v570, %v566
      %v691 = vpack.c.b16 %v575, %v571
      %v692 = vpack.c.b16 %v576, %v572
      %v693 = vpack.c.b16 %v577, %v573
      %v694 = vpack.c.b16 %v578, %v574
      %v695 = vpack.c.b16 %v583, %v579
      %v696 = vpack.c.b16 %v584, %v580
      %v697 = vpack.c.b16 %v585, %v581
      %v698 = vpack.c.b16 %v586, %v582
      %v699 = vpack.c.b16 %v591, %v587
      %v700 = vpack.c.b16 %v592, %v588
      %v701 = vpack.c.b16 %v593, %v589
      %v702 = vpack.c.b16 %v594, %v590
      %v703 = vpack.c.b16 %v599, %v595
      %v704 = vpack.c.b16 %v600, %v596
      %v705 = vpack.c.b16 %v601, %v597
      %v706 = vpack.c.b16 %v602, %v598
      %v707 = vpack.c.b16 %v607, %v603
      %v708 = vpack.c.b16 %v608, %v604
      %v709 = vpack.c.b16 %v609, %v605
      %v710 = vpack.c.b16 %v610, %v606
      %v711 = vpack.c.b16 %v615, %v611
      %v712 = vpack.c.b16 %v616, %v612
      %v713 = vpack.c.b16 %v617, %v613
      %v714 = vpack.c.b16 %v618, %v614
      %v715 = vpack.c.b16 %v623, %v619
      %v716 = vpack.c.b16 %v624, %v620
      %v717 = vpack.c.b16 %v625, %v621
      %v718 = vpack.c.b16 %v626, %v622
      %v719 = vpack.c.b16 %v631, %v627
      %v720 = vpack.c.b16 %v632, %v628
      %v721 = vpack.c.b16 %v633, %v629
      %v722 = vpack.c.b16 %v634, %v630
      %v723 = vpack.c.b16 %v639, %v635
      %v724 = vpack.c.b16 %v640, %v636
      %v725 = vpack.c.b16 %v641, %v637
      %v726 = vpack.c.b16 %v642, %v638
      %v727 = vpack.c.b16 %v647, %v643
      %v728 = vpack.c.b16 %v648, %v644
      %v729 = vpack.c.b16 %v649, %v645
      %v730 = vpack.c.b16 %v650, %v646
      %v731 = vpack.c.b16 %v655, %v651
      %v732 = vpack.c.b16 %v656, %v652
      %v733 = vpack.c.b16 %v657, %v653
      %v734 = vpack.c.b16 %v658, %v654
      %v735 = vpack.c.b16 %v663, %v659
      %v736 = vpack.c.b16 %v664, %v660
      %v737 = vpack.c.b16 %v665, %v661
      %v738 = vpack.c.b16 %v666, %v662
      %v739 = vpack.c.b16 %v671, %v667
      %v740 = vpack.c.b16 %v672, %v668
      %v741 = vpack.c.b16 %v673, %v669
      %v742 = vpack.c.b16 %v674, %v670
      %v743 = vpack.c.b16 %v679, %v675
      %v744 = vpack.c.b16 %v680, %v676
      %v745 = vpack.c.b16 %v681, %v677
      %v746 = vpack.c.b16 %v682, %v678
      %811 = vmatprep.subr.bf16.mxu0 %v684
      %812 = vmatpush1.bf16.msra.mxu0 %v683
      %813 = vmatprep.subr.bf16.mxu0 %v688
      %814 = vmatpush1.bf16.msra.mxu0 %v687
      %815 = vmatprep.subr.bf16.mxu0 %v692
      %816 = vmatpush1.bf16.msra.mxu0 %v691
      %817 = vmatprep.subr.bf16.mxu0 %v696
      %818 = vmatpush1.bf16.msra.mxu0 %v695
      %819 = vmatprep.subr.bf16.mxu0 %v700
      %820 = vmatpush1.bf16.msra.mxu0 %v699
      %821 = vmatprep.subr.bf16.mxu0 %v704
      %822 = vmatpush1.bf16.msra.mxu0 %v703
      %823 = vmatprep.subr.bf16.mxu0 %v708
      %824 = vmatpush1.bf16.msra.mxu0 %v707
      %825 = vmatprep.subr.bf16.mxu0 %v712
      %826 = vmatpush1.bf16.msra.mxu0 %v711
      %827 = vmatprep.subr.bf16.mxu0 %v716
      %828 = vmatpush1.bf16.msra.mxu0 %v715
      %829 = vmatprep.subr.bf16.mxu0 %v720
      %830 = vmatpush1.bf16.msra.mxu0 %v719
      %831 = vmatprep.subr.bf16.mxu0 %v724
      %832 = vmatpush1.bf16.msra.mxu0 %v723
      %833 = vmatprep.subr.bf16.mxu0 %v728
      %834 = vmatpush1.bf16.msra.mxu0 %v727
      %835 = vmatprep.subr.bf16.mxu0 %v732
      %836 = vmatpush1.bf16.msra.mxu0 %v731
      %837 = vmatprep.subr.bf16.mxu0 %v736
      %838 = vmatpush1.bf16.msra.mxu0 %v735
      %839 = vmatprep.subr.bf16.mxu0 %v740
      %840 = vmatpush1.bf16.msra.mxu0 %v739
      %841 = vmatprep.subr.bf16.mxu0 %v744
      %842 = vmatpush1.bf16.msra.mxu0 %v743
      %843 = vmatprep.mubr.bf16.mxu0 %v402
      %844 = vmatmul.mubr.bf16.gmra.mrb[0].mxu0 %v401
      %v845 = vpop.f32.mrb[0].mxu0
      %v846 = vadd.f32 %v474, %v845
      %v847 = vpop.f32.mrb[0].mxu0
      %v848 = vadd.f32 %v478, %v847
      %v849 = vpop.f32.mrb[0].mxu0
      %v850 = vadd.f32 %v474, %v849
      %v851 = vpop.f32.mrb[0].mxu0
      %v852 = vadd.f32 %v478, %v851
      %853 = vmatprep.mubr.bf16.mxu0 %v404
      %854 = vmatmul.mubr.bf16.gmra.mrb[0].mxu0 %v403
      %v855 = vpop.f32.mrb[0].mxu0
      %v856 = vadd.f32 %v474, %v855
      %v857 = vpop.f32.mrb[0].mxu0
      %v858 = vadd.f32 %v478, %v857
      %v859 = vpop.f32.mrb[0].mxu0
      %v860 = vadd.f32 %v474, %v859
      %v861 = vpop.f32.mrb[0].mxu0
      %v862 = vadd.f32 %v478, %v861
      %863 = vdwg.mxu0
      %864 = vmatprep.subr.bf16.mxu0 %v686
      %865 = vmatpush1.bf16.msra.mxu0 %v685
      %866 = vmatprep.subr.bf16.mxu0 %v690
      %867 = vmatpush1.bf16.msra.mxu0 %v689
      %868 = vmatprep.subr.bf16.mxu0 %v694
      %869 = vmatpush1.bf16.msra.mxu0 %v693
      %870 = vmatprep.subr.bf16.mxu0 %v698
      %871 = vmatpush1.bf16.msra.mxu0 %v697
      %872 = vmatprep.subr.bf16.mxu0 %v702
      %873 = vmatpush1.bf16.msra.mxu0 %v701
      %874 = vmatprep.subr.bf16.mxu0 %v706
      %875 = vmatpush1.bf16.msra.mxu0 %v705
      %876 = vmatprep.subr.bf16.mxu0 %v710
      %877 = vmatpush1.bf16.msra.mxu0 %v709
      %878 = vmatprep.subr.bf16.mxu0 %v714
      %879 = vmatpush1.bf16.msra.mxu0 %v713
      %880 = vmatprep.subr.bf16.mxu0 %v718
      %881 = vmatpush1.bf16.msra.mxu0 %v717
      %882 = vmatprep.subr.bf16.mxu0 %v722
      %883 = vmatpush1.bf16.msra.mxu0 %v721
      %884 = vmatprep.subr.bf16.mxu0 %v726
      %885 = vmatpush1.bf16.msra.mxu0 %v725
      %886 = vmatprep.subr.bf16.mxu0 %v730
      %887 = vmatpush1.bf16.msra.mxu0 %v729
      %888 = vmatprep.subr.bf16.mxu0 %v734
      %889 = vmatpush1.bf16.msra.mxu0 %v733
      %890 = vmatprep.subr.bf16.mxu0 %v738
      %891 = vmatpush1.bf16.msra.mxu0 %v737
      %892 = vmatprep.subr.bf16.mxu0 %v742
      %893 = vmatpush1.bf16.msra.mxu0 %v741
      %894 = vmatprep.subr.bf16.mxu0 %v746
      %895 = vmatpush1.bf16.msra.mxu0 %v745
      %896 = vmatprep.mubr.bf16.mxu0 %v402
      %897 = vmatmul.mubr.bf16.gmra.mrb[0].mxu0 %v401
      %v898 = vpop.f32.mrb[0].mxu0
      %v899 = vadd.f32 %v482, %v898
      %v900 = vpop.f32.mrb[0].mxu0
      %v901 = vadd.f32 %v486, %v900
      %v902 = vpop.f32.mrb[0].mxu0
      %v903 = vadd.f32 %v482, %v902
      %v904 = vpop.f32.mrb[0].mxu0
      %v905 = vadd.f32 %v486, %v904
      %906 = vmatprep.mubr.bf16.mxu0 %v404
      %907 = vmatmul.mubr.bf16.gmra.mrb[0].mxu0 %v403
      %v908 = vpop.f32.mrb[0].mxu0
      %v909 = vadd.f32 %v482, %v908
      %v910 = vpop.f32.mrb[0].mxu0
      %v911 = vadd.f32 %v486, %v910
      %v912 = vpop.f32.mrb[0].mxu0
      %v913 = vadd.f32 %v482, %v912
      %v914 = vpop.f32.mrb[0].mxu0
      %v915 = vadd.f32 %v486, %v914
      %916 = vdwg.mxu0
      %v917 = vmax.f32 %v846, 0.0
      %v918 = vmax.f32 %v848, 0.0
      %v919 = vmax.f32 %v899, 0.0
      %v920 = vmax.f32 %v901, 0.0
      %v921 = vmax.f32 %v850, 0.0
      %v922 = vmax.f32 %v852, 0.0
      %v923 = vmax.f32 %v903, 0.0
      %v924 = vmax.f32 %v905, 0.0
      %v925 = vmax.f32 %v856, 0.0
      %v926 = vmax.f32 %v858, 0.0
      %v927 = vmax.f32 %v909, 0.0
      %v928 = vmax.f32 %v911, 0.0
      %v929 = vmax.f32 %v860, 0.0
      %v930 = vmax.f32 %v862, 0.0
      %v931 = vmax.f32 %v913, 0.0
      %v932 = vmax.f32 %v915, 0.0
      %v933 = vpack.c.bf16 %v921, %v917
      %v934 = vpack.c.bf16 %v922, %v918
      %v935 = vpack.c.bf16 %v923, %v919
      %v936 = vpack.c.bf16 %v924, %v920
      %v937 = vpack.c.bf16 %v929, %v925
      %v938 = vpack.c.bf16 %v930, %v926
      %v939 = vpack.c.bf16 %v931, %v927
      %v940 = vpack.c.bf16 %v932, %v928
      %v941 = vld [vmem:[%s5] sm:$0xf]
      %v942 = vld [vmem:[%s5 + $0x4] sm:$0xf]
      %v943 = vld [vmem:[%s5 + $0x8] sm:$0xf]
      %v944 = vld [vmem:[%s5 + $0xc] sm:$0xf]
      %v945 = vld [vmem:[%s5 + $0x10] sm:$0xf]
      %v946 = vld [vmem:[%s5 + $0x14] sm:$0xf]
      %v947 = vld [vmem:[%s5 + $0x18] sm:$0xf]
      %v948 = vld [vmem:[%s5 + $0x1c] sm:$0xf]
      %v949 = vld [vmem:[%s5 + $0x20] sm:$0xf]
      %v950 = vld [vmem:[%s5 + $0x24] sm:$0xf]
      %v951 = vld [vmem:[%s5 + $0x28] sm:$0xf]
      %v952 = vld [vmem:[%s5 + $0x2c] sm:$0xf]
      %v953 = vld [vmem:[%s5 + $0x30] sm:$0xf]
      %v954 = vld [vmem:[%s5 + $0x34] sm:$0xf]
      %v955 = vld [vmem:[%s5 + $0x38] sm:$0xf]
      %v956 = vld [vmem:[%s5 + $0x3c] sm:$0xf]
      %v957 = vld [vmem:[%s5 + $0x40] sm:$0xf]
      %v958 = vld [vmem:[%s5 + $0x44] sm:$0xf]
      %v959 = vld [vmem:[%s5 + $0x48] sm:$0xf]
      %v960 = vld [vmem:[%s5 + $0x4c] sm:$0xf]
      %v961 = vld [vmem:[%s5 + $0x50] sm:$0xf]
      %v962 = vld [vmem:[%s5 + $0x54] sm:$0xf]
      %v963 = vld [vmem:[%s5 + $0x58] sm:$0xf]
      %v964 = vld [vmem:[%s5 + $0x5c] sm:$0xf]
      %v965 = vld [vmem:[%s5 + $0x60] sm:$0xf]
      %v966 = vld [vmem:[%s5 + $0x64] sm:$0xf]
      %v967 = vld [vmem:[%s5 + $0x68] sm:$0xf]
      %v968 = vld [vmem:[%s5 + $0x6c] sm:$0xf]
      %v969 = vld [vmem:[%s5 + $0x70] sm:$0xf]
      %v970 = vld [vmem:[%s5 + $0x74] sm:$0xf]
      %v971 = vld [vmem:[%s5 + $0x78] sm:$0xf]
      %v972 = vld [vmem:[%s5 + $0x7c] sm:$0xf]
      %v973 = vld [vmem:[%s5 + $0x80] sm:$0xf]
      %v974 = vld [vmem:[%s5 + $0x84] sm:$0xf]
      %v975 = vld [vmem:[%s5 + $0x88] sm:$0xf]
      %v976 = vld [vmem:[%s5 + $0x8c] sm:$0xf]
      %v977 = vld [vmem:[%s5 + $0x90] sm:$0xf]
      %v978 = vld [vmem:[%s5 + $0x94] sm:$0xf]
      %v979 = vld [vmem:[%s5 + $0x98] sm:$0xf]
      %v980 = vld [vmem:[%s5 + $0x9c] sm:$0xf]
      %v981 = vld [vmem:[%s5 + $0xa0] sm:$0xf]
      %v982 = vld [vmem:[%s5 + $0xa4] sm:$0xf]
      %v983 = vld [vmem:[%s5 + $0xa8] sm:$0xf]
      %v984 = vld [vmem:[%s5 + $0xac] sm:$0xf]
      %v985 = vld [vmem:[%s5 + $0xb0] sm:$0xf]
      %v986 = vld [vmem:[%s5 + $0xb4] sm:$0xf]
      %v987 = vld [vmem:[%s5 + $0xb8] sm:$0xf]
      %v988 = vld [vmem:[%s5 + $0xbc] sm:$0xf]
      %v989 = vld [vmem:[%s5 + $0xc0] sm:$0xf]
      %v990 = vld [vmem:[%s5 + $0xc4] sm:$0xf]
      %v991 = vld [vmem:[%s5 + $0xc8] sm:$0xf]
      %v992 = vld [vmem:[%s5 + $0xcc] sm:$0xf]
      %v993 = vld [vmem:[%s5 + $0xd0] sm:$0xf]
      %v994 = vld [vmem:[%s5 + $0xd4] sm:$0xf]
      %v995 = vld [vmem:[%s5 + $0xd8] sm:$0xf]
      %v996 = vld [vmem:[%s5 + $0xdc] sm:$0xf]
      %v997 = vld [vmem:[%s5 + $0xe0] sm:$0xf]
      %v998 = vld [vmem:[%s5 + $0xe4] sm:$0xf]
      %v999 = vld [vmem:[%s5 + $0xe8] sm:$0xf]
      %v1000 = vld [vmem:[%s5 + $0xec] sm:$0xf]
      %v1001 = vld [vmem:[%s5 + $0xf0] sm:$0xf]
      %v1002 = vld [vmem:[%s5 + $0xf4] sm:$0xf]
      %v1003 = vld [vmem:[%s5 + $0xf8] sm:$0xf]
      %v1004 = vld [vmem:[%s5 + $0xfc] sm:$0xf]
      %v1005 = vld [vmem:[%s6] sm:$0x1]
      %v1007 = vlaneseq
      %v1008 = vshrl.u32 %v1007, 7
      %v1009 = vsub.s32 0, %v1008
      %v1010 = vrot.slane %v1005, %v1009
      %v1076 = vunpack.c.l.b16 %v941
      %v1077 = vunpack.c.l.b16 %v942
      %v1078 = vunpack.c.l.b16 %v943
      %v1079 = vunpack.c.l.b16 %v944
      %v1080 = vunpack.c.l.b16 %v945
      %v1081 = vunpack.c.l.b16 %v946
      %v1082 = vunpack.c.l.b16 %v947
      %v1083 = vunpack.c.l.b16 %v948
      %v1084 = vunpack.c.l.b16 %v949
      %v1085 = vunpack.c.l.b16 %v950
      %v1086 = vunpack.c.l.b16 %v951
      %v1087 = vunpack.c.l.b16 %v952
      %v1088 = vunpack.c.l.b16 %v953
      %v1089 = vunpack.c.l.b16 %v954
      %v1090 = vunpack.c.l.b16 %v955
      %v1091 = vunpack.c.l.b16 %v956
      %v1092 = vunpack.c.l.b16 %v957
      %v1093 = vunpack.c.l.b16 %v958
      %v1094 = vunpack.c.l.b16 %v959
      %v1095 = vunpack.c.l.b16 %v960
      %v1096 = vunpack.c.l.b16 %v961
      %v1097 = vunpack.c.l.b16 %v962
      %v1098 = vunpack.c.l.b16 %v963
      %v1099 = vunpack.c.l.b16 %v964
      %v1100 = vunpack.c.l.b16 %v965
      %v1101 = vunpack.c.l.b16 %v966
      %v1102 = vunpack.c.l.b16 %v967
      %v1103 = vunpack.c.l.b16 %v968
      %v1104 = vunpack.c.l.b16 %v969
      %v1105 = vunpack.c.l.b16 %v970
      %v1106 = vunpack.c.l.b16 %v971
      %v1107 = vunpack.c.l.b16 %v972
      %v1108 = vunpack.c.l.b16 %v973
      %v1109 = vunpack.c.l.b16 %v974
      %v1110 = vunpack.c.l.b16 %v975
      %v1111 = vunpack.c.l.b16 %v976
      %v1112 = vunpack.c.l.b16 %v977
      %v1113 = vunpack.c.l.b16 %v978
      %v1114 = vunpack.c.l.b16 %v979
      %v1115 = vunpack.c.l.b16 %v980
      %v1116 = vunpack.c.l.b16 %v981
      %v1117 = vunpack.c.l.b16 %v982
      %v1118 = vunpack.c.l.b16 %v983
      %v1119 = vunpack.c.l.b16 %v984
      %v1120 = vunpack.c.l.b16 %v985
      %v1121 = vunpack.c.l.b16 %v986
      %v1122 = vunpack.c.l.b16 %v987
      %v1123 = vunpack.c.l.b16 %v988
      %v1124 = vunpack.c.l.b16 %v989
      %v1125 = vunpack.c.l.b16 %v990
      %v1126 = vunpack.c.l.b16 %v991
      %v1127 = vunpack.c.l.b16 %v992
      %v1128 = vunpack.c.l.b16 %v993
      %v1129 = vunpack.c.l.b16 %v994
      %v1130 = vunpack.c.l.b16 %v995
      %v1131 = vunpack.c.l.b16 %v996
      %v1132 = vunpack.c.l.b16 %v997
      %v1133 = vunpack.c.l.b16 %v998
      %v1134 = vunpack.c.l.b16 %v999
      %v1135 = vunpack.c.l.b16 %v1000
      %v1136 = vunpack.c.l.b16 %v1001
      %v1137 = vunpack.c.l.b16 %v1002
      %v1138 = vunpack.c.l.b16 %v1003
      %v1139 = vunpack.c.l.b16 %v1004
      %v1140 = vpack.c.b16 %v1077, %v1076
      %v1141 = vpack.c.b16 %v1079, %v1078
      %v1142 = vpack.c.b16 %v1081, %v1080
      %v1143 = vpack.c.b16 %v1083, %v1082
      %v1144 = vpack.c.b16 %v1085, %v1084
      %v1145 = vpack.c.b16 %v1087, %v1086
      %v1146 = vpack.c.b16 %v1089, %v1088
      %v1147 = vpack.c.b16 %v1091, %v1090
      %v1148 = vpack.c.b16 %v1093, %v1092
      %v1149 = vpack.c.b16 %v1095, %v1094
      %v1150 = vpack.c.b16 %v1097, %v1096
      %v1151 = vpack.c.b16 %v1099, %v1098
      %v1152 = vpack.c.b16 %v1101, %v1100
      %v1153 = vpack.c.b16 %v1103, %v1102
      %v1154 = vpack.c.b16 %v1105, %v1104
      %v1155 = vpack.c.b16 %v1107, %v1106
      %v1156 = vpack.c.b16 %v1109, %v1108
      %v1157 = vpack.c.b16 %v1111, %v1110
      %v1158 = vpack.c.b16 %v1113, %v1112
      %v1159 = vpack.c.b16 %v1115, %v1114
      %v1160 = vpack.c.b16 %v1117, %v1116
      %v1161 = vpack.c.b16 %v1119, %v1118
      %v1162 = vpack.c.b16 %v1121, %v1120
      %v1163 = vpack.c.b16 %v1123, %v1122
      %v1164 = vpack.c.b16 %v1125, %v1124
      %v1165 = vpack.c.b16 %v1127, %v1126
      %v1166 = vpack.c.b16 %v1129, %v1128
      %v1167 = vpack.c.b16 %v1131, %v1130
      %v1168 = vpack.c.b16 %v1133, %v1132
      %v1169 = vpack.c.b16 %v1135, %v1134
      %v1170 = vpack.c.b16 %v1137, %v1136
      %v1171 = vpack.c.b16 %v1139, %v1138
      %1204 = vmatprep.subr.bf16.mxu0 0
      %1205 = vmatpush1.bf16.msra.mxu0 %v1140
      %1206 = vmatprep.subr.bf16.mxu0 0
      %1207 = vmatpush1.bf16.msra.mxu0 %v1141
      %1208 = vmatprep.subr.bf16.mxu0 0
      %1209 = vmatpush1.bf16.msra.mxu0 %v1142
      %1210 = vmatprep.subr.bf16.mxu0 0
      %1211 = vmatpush1.bf16.msra.mxu0 %v1143
      %1212 = vmatprep.subr.bf16.mxu0 0
      %1213 = vmatpush1.bf16.msra.mxu0 %v1144
      %1214 = vmatprep.subr.bf16.mxu0 0
      %1215 = vmatpush1.bf16.msra.mxu0 %v1145
      %1216 = vmatprep.subr.bf16.mxu0 0
      %1217 = vmatpush1.bf16.msra.mxu0 %v1146
      %1218 = vmatprep.subr.bf16.mxu0 0
      %1219 = vmatpush1.bf16.msra.mxu0 %v1147
      %1220 = vmatprep.subr.bf16.mxu0 0
      %1221 = vmatpush1.bf16.msra.mxu0 %v1148
      %1222 = vmatprep.subr.bf16.mxu0 0
      %1223 = vmatpush1.bf16.msra.mxu0 %v1149
      %1224 = vmatprep.subr.bf16.mxu0 0
      %1225 = vmatpush1.bf16.msra.mxu0 %v1150
      %1226 = vmatprep.subr.bf16.mxu0 0
      %1227 = vmatpush1.bf16.msra.mxu0 %v1151
      %1228 = vmatprep.subr.bf16.mxu0 0
      %1229 = vmatpush1.bf16.msra.mxu0 %v1152
      %1230 = vmatprep.subr.bf16.mxu0 0
      %1231 = vmatpush1.bf16.msra.mxu0 %v1153
      %1232 = vmatprep.subr.bf16.mxu0 0
      %1233 = vmatpush1.bf16.msra.mxu0 %v1154
      %1234 = vmatprep.subr.bf16.mxu0 0
      %1235 = vmatpush1.bf16.msra.mxu0 %v1155
      %1236 = vmatprep.mubr.bf16.mxu0 %v934
      %1237 = vmatmul.mubr.bf16.gmra.mrb[0].mxu0 %v933
      %v1238 = vpop.f32.mrb[0].mxu0
      %v1239 = vadd.f32 %v1010, %v1238
      %v1240 = vpop.f32.mrb[0].mxu0
      %v1241 = vpop.f32.mrb[0].mxu0
      %v1242 = vadd.f32 %v1010, %v1241
      %v1243 = vpop.f32.mrb[0].mxu0
      %1244 = vmatprep.mubr.bf16.mxu0 %v938
      %1245 = vmatmul.mubr.bf16.gmra.mrb[0].mxu0 %v937
      %v1246 = vpop.f32.mrb[0].mxu0
      %v1247 = vadd.f32 %v1010, %v1246
      %v1248 = vpop.f32.mrb[0].mxu0
      %v1249 = vpop.f32.mrb[0].mxu0
      %v1250 = vadd.f32 %v1010, %v1249
      %v1251 = vpop.f32.mrb[0].mxu0
      %1252 = vdwg.mxu0
      %1253 = vmatprep.subr.bf16.mxu0 0
      %1254 = vmatpush1.bf16.msra.mxu0 %v1156
      %1255 = vmatprep.subr.bf16.mxu0 0
      %1256 = vmatpush1.bf16.msra.mxu0 %v1157
      %1257 = vmatprep.subr.bf16.mxu0 0
      %1258 = vmatpush1.bf16.msra.mxu0 %v1158
      %1259 = vmatprep.subr.bf16.mxu0 0
      %1260 = vmatpush1.bf16.msra.mxu0 %v1159
      %1261 = vmatprep.subr.bf16.mxu0 0
      %1262 = vmatpush1.bf16.msra.mxu0 %v1160
      %1263 = vmatprep.subr.bf16.mxu0 0
      %1264 = vmatpush1.bf16.msra.mxu0 %v1161
      %1265 = vmatprep.subr.bf16.mxu0 0
      %1266 = vmatpush1.bf16.msra.mxu0 %v1162
      %1267 = vmatprep.subr.bf16.mxu0 0
      %1268 = vmatpush1.bf16.msra.mxu0 %v1163
      %1269 = vmatprep.subr.bf16.mxu0 0
      %1270 = vmatpush1.bf16.msra.mxu0 %v1164
      %1271 = vmatprep.subr.bf16.mxu0 0
      %1272 = vmatpush1.bf16.msra.mxu0 %v1165
      %1273 = vmatprep.subr.bf16.mxu0 0
      %1274 = vmatpush1.bf16.msra.mxu0 %v1166
      %1275 = vmatprep.subr.bf16.mxu0 0
      %1276 = vmatpush1.bf16.msra.mxu0 %v1167
      %1277 = vmatprep.subr.bf16.mxu0 0
      %1278 = vmatpush1.bf16.msra.mxu0 %v1168
      %1279 = vmatprep.subr.bf16.mxu0 0
      %1280 = vmatpush1.bf16.msra.mxu0 %v1169
      %1281 = vmatprep.subr.bf16.mxu0 0
      %1282 = vmatpush1.bf16.msra.mxu0 %v1170
      %1283 = vmatprep.subr.bf16.mxu0 0
      %1284 = vmatpush1.bf16.msra.mxu0 %v1171
      %1285 = vmatprep.mubr.bf16.mxu0 %v936
      %1286 = vmatmul.mubr.bf16.gmra.mrb[0].mxu0 %v935
      %v1287 = vpop.f32.mrb[0].mxu0
      %v1288 = vadd.f32 %v1239, %v1287
      %v1289 = vpop.f32.mrb[0].mxu0
      %v1290 = vpop.f32.mrb[0].mxu0
      %v1291 = vadd.f32 %v1242, %v1290
      %v1292 = vpop.f32.mrb[0].mxu0
      %1293 = vmatprep.mubr.bf16.mxu0 %v940
      %1294 = vmatmul.mubr.bf16.gmra.mrb[0].mxu0 %v939
      %v1295 = vpop.f32.mrb[0].mxu0
      %v1296 = vadd.f32 %v1247, %v1295
      %v1297 = vpop.f32.mrb[0].mxu0
      %v1298 = vpop.f32.mrb[0].mxu0
      %v1299 = vadd.f32 %v1250, %v1298
      %v1300 = vpop.f32.mrb[0].mxu0
      %1301 = vdwg.mxu0
      %1302 = vmax.xlane.f32.xlu0 %v1288
      %v1303 = vpop.xlane.xlu0 %1302
      %1304 = vmax.xlane.f32.xlu0 %v1291
      %v1305 = vpop.xlane.xlu0 %1304
      %1306 = vmax.xlane.f32.xlu0 %v1296
      %v1307 = vpop.xlane.xlu0 %1306
      %1308 = vmax.xlane.f32.xlu0 %v1299
      %v1309 = vpop.xlane.xlu0 %1308
      %v1310 = vsub.f32 %v1288, %v1303
      %v1311 = vsub.f32 %v1291, %v1305
      %v1312 = vsub.f32 %v1296, %v1307
      %v1313 = vsub.f32 %v1299, %v1309
      %v1314 = vmul.f32 %v1310, 1.442695
      %v1315 = vpow.pop %v1314
      %v1316 = vmul.f32 %v1311, 1.442695
      %v1317 = vpow.pop %v1316
      %v1318 = vmul.f32 %v1312, 1.442695
      %v1319 = vpow.pop %v1318
      %v1320 = vmul.f32 %v1313, 1.442695
      %v1321 = vpow.pop %v1320
      %1322 = vadd.xlane.f32.xlu0 %v1315
      %v1323 = vpop.xlane.xlu0 %1322
      %1324 = vadd.xlane.f32.xlu0 %v1317
      %v1325 = vpop.xlane.xlu0 %1324
      %1326 = vadd.xlane.f32.xlu0 %v1319
      %v1327 = vpop.xlane.xlu0 %1326
      %1328 = vadd.xlane.f32.xlu0 %v1321
      %v1329 = vpop.xlane.xlu0 %1328
      %v1330 = vlog2.pop %v1323
      %v1331 = vmul.f32 %v1330, 0.6931472
      %v1332 = vlog2.pop %v1325
      %v1333 = vmul.f32 %v1332, 0.6931472
      %v1334 = vlog2.pop %v1327
      %v1335 = vmul.f32 %v1334, 0.6931472
      %v1336 = vlog2.pop %v1329
      %v1337 = vmul.f32 %v1336, 0.6931472
      %v1338 = vsub.f32 %v1310, %v1331
      %v1339 = vsub.f32 %v1311, %v1333
      %v1340 = vsub.f32 %v1312, %v1335
      %v1341 = vsub.f32 %v1313, %v1337
      %1342 = vst [vmem:[%s280] sm:$0xff] %v1338
      %1343 = vst [vmem:[%s280 + $0x8] sm:$0xff] %v1339
      %1344 = vst [vmem:[%s280 + $0x10] sm:$0xff] %v1340
      %1345 = vst [vmem:[%s280 + $0x18] sm:$0xff] %v1341
      %s1346 = smul.u32 4, %s18
      %p1347 = scmp.lt.s32.totalorder %s1346, 7
      %s1348 = scalar_select %p1347, %s1346, 7
      %s1349 = smul.addr %s1348, 8
      %s1350 = scalar_lea.vmem %s7, %s1349
      // Predicated region
      $region49: #{vec_classifier.1} parent=47 // pred_check
        %p1351 = pneg %p188
      $region50: #{vec_classifier.1} parent=47 // pred_check_branch
        %1353 = sbr.rel (%p1351) target = $region52
      $region51: #{vec_classifier.1} parent=47 // pred_region
        %s1354 = smul.u32 4, %s18
      $region52: #{vec_classifier.1} parent=47 // pred_fallthru
        _
    $region48: #{vec_classifier.1} parent=5 // pred_fallthru
      _
    %p1355 = scmp.le.s32.totalorder 2, %s13
    // Predicated region
    $region53: #{vec_classifier.1} parent=5 // pred_check
      %p1356 = pneg %p1355
    $region54: #{vec_classifier.1} parent=5 // pred_check_branch
      %1358 = sbr.rel (%p1356) target = $region56
    $region55: #{vec_classifier.1} parent=5 // pred_region
      %s1359 = ssub.s32 %s13, 2
      // Predicated region
      $region57: #{vec_classifier.1} parent=55 // pred_check
        %p1360 = pneg %p194
      $region58: #{vec_classifier.1} parent=55 // pred_check_branch
        %1362 = sbr.rel (%p1360) target = $region60
      $region59: #{vec_classifier.1} parent=55 // pred_region
        %s1363 = smul.u32 4, %s19
        %p1364 = scmp.lt.s32.totalorder %s1363, 7
        %s1365 = scalar_select %p1364, %s1363, 7
        %s1366 = smul.addr %s1365, 8
        %s1367 = scalar_lea.vmem %s7, %s1366
      $region60: #{vec_classifier.1} parent=55 // pred_fallthru
        _
    $region56: #{vec_classifier.1} parent=5 // pred_fallthru
      _
  $region6: #{vec_classifier.1} parent=0 // loop_footer
    %s17 = sadd.s32 1, %s13
  $region7: #{vec_classifier.1} parent=0 // loop_footer_branch
    %12 = sbr.rel target = $region3
  $region8: #{vec_classifier.1} parent=0 // loop_exit
    _

</llo_original>
